<compile_context>
chip_gen: v7x
topology: tpu7x:2x2x1
jax: 0.10.0
libtpu: 0.0.40
codegen_flags: <defaults>
</compile_context>

<pallas_src>
import functools

import jax
import jax.numpy as jnp
from jax.experimental import pallas as pl
from jax.experimental.pallas import tpu as pltpu

EPS = 1e-5


def _round_up(n, m):
    return (n + m - 1) // m * m


def residual_block_kernel(x_ref, w1_ref, g1_ref, b1_ref, w2_ref, g2_ref,
                          b2_ref, ml_ref, mc_ref, mr_ref, o_ref, *, inv_count):
    x = x_ref[...]                       # (Cp, Mp) f32, zero in padded region
    ml = ml_ref[...]                     # (1, Mp) left-tap mask  (l != 0  & valid)
    mc = mc_ref[...]                     # (1, Mp) validity mask  (col < N*L)
    mr = mr_ref[...]                     # (1, Mp) right-tap mask (l != L-1 & valid)
    Mp = x.shape[1]

    def conv(h, w_flat):
        # 'same' Conv1d, kernel=3, stride=1, pad=1, no bias — one fused matmul.
        h_left = pltpu.roll(h, shift=1, axis=1) * ml         # h[l-1]
        h_cent = h * mc
        h_right = pltpu.roll(h, shift=Mp - 1, axis=1) * mr   # h[l+1] (== -1)
        h_cat = jnp.concatenate([h_left, h_cent, h_right], axis=0)  # (3Cp, Mp)
        # TODO(synk): on v6e/v7x, bf16 operands with f32 accumulation would
        # raise MXU throughput if precision budget allows.
        return jnp.dot(w_flat, h_cat, preferred_element_type=jnp.float32)

    def bn(h, gamma, beta):
        # Training-mode BatchNorm1d: per-channel stats over the valid columns,
        # biased variance; folded to a 2-op scale/shift apply.
        mean = jnp.sum(h, axis=1, keepdims=True) * inv_count
        hc = (h - mean) * mc             # mask pads so they don't pollute var
        var = jnp.sum(hc * hc, axis=1, keepdims=True) * inv_count
        scale = gamma * jax.lax.rsqrt(var + EPS)
        return hc * scale + beta

    h = conv(x, w1_ref[...])
    h = bn(h, g1_ref[...], b1_ref[...])
    h = jnp.maximum(h, 0.0)              # ReLU
    h = conv(h, w2_ref[...])
    h = bn(h, g2_ref[...], b2_ref[...])
    o_ref[...] = (x + h).astype(o_ref.dtype)   # residual add


def residual_block(x, w1, g1, b1, w2, g2, b2):
    """x: (N, C, L); w*: (C, C, 3); g*/b*: (C,). Returns (N, C, L)."""
    N, C, L = x.shape
    M = N * L
    Cp = _round_up(C, 8)
    Mp = _round_up(M, 128)

    # ---- layout plumbing (outside the kernel) ----
    # x: (N, C, L) -> lane-dense (C, N*L), zero-padded to (Cp, Mp).
    xt = jnp.transpose(x, (1, 0, 2)).reshape(C, M).astype(jnp.float32)
    xp = jnp.zeros((Cp, Mp), jnp.float32).at[:C, :M].set(xt)

    def flat_w(w):
        # (C, C, 3) -> pad (Cp, Cp, 3) -> (Cp, 3, Cp) -> (Cp, 3*Cp);
        # column order [tap0 | tap1 | tap2] matches the kernel's concat.
        wp = jnp.zeros((Cp, Cp, 3), jnp.float32).at[:C, :C, :].set(
            w.astype(jnp.float32))
        return jnp.transpose(wp, (0, 2, 1)).reshape(Cp, 3 * Cp)

    def pad_ch(v, fill):
        return jnp.full((Cp, 1), fill, jnp.float32).at[:C, 0].set(
            v.astype(jnp.float32))

    w1f, w2f = flat_w(w1), flat_w(w2)
    g1p, b1p = pad_ch(g1, 1.0), pad_ch(b1, 0.0)
    g2p, b2p = pad_ch(g2, 1.0), pad_ch(b2, 0.0)

    # Hoisted boundary + validity masks in the flattened layout. Zeroing the
    # l==0 / l==L-1 taps also prevents cross-batch halo leakage from the roll.
    col = jnp.arange(Mp, dtype=jnp.int32)
    valid = col < M
    ml = (valid & (col % L != 0)).astype(jnp.float32).reshape(1, Mp)
    mc = valid.astype(jnp.float32).reshape(1, Mp)
    mr = (valid & (col % L != L - 1)).astype(jnp.float32).reshape(1, Mp)

    vmem = pl.BlockSpec(memory_space=pltpu.MemorySpace.VMEM)
    kernel = functools.partial(residual_block_kernel, inv_count=1.0 / M)
    # TODO(synk): for large N*L, tile over a grid with a two-pass structure
    # (pass 1: conv1 + per-channel sum/sumsq accumulation; pass 2: BN + ReLU +
    # conv2 + BN + residual) so BlockSpec pipelining hides HBM traffic and the
    # VMEM ceiling (64 MiB on v7x) is respected; single-shot is fine here.
    outp = pl.pallas_call(
        kernel,
        out_shape=jax.ShapeDtypeStruct((Cp, Mp), jnp.float32),
        in_specs=[vmem] * 10,
        out_specs=vmem,
        compiler_params=pltpu.CompilerParams(
            vmem_limit_bytes=32 * 1024 * 1024),
    )(xp, w1f, g1p, b1p, w2f, g2p, b2p, ml, mc, mr)

    out = outp[:C, :M].reshape(C, N, L).transpose(1, 0, 2)
    return out.astype(x.dtype)


if __name__ == "__main__":
    key = jax.random.PRNGKey(0)
    N, C, L = 2, 4, 16
    k_x, k_w1, k_w2 = jax.random.split(key, 3)

    x = jax.random.normal(k_x, (N, C, L), dtype=jnp.float32)
    # Deterministic synthetic weights (scaled like PyTorch's fan-in init).
    fan_in = C * 3
    w1 = jax.random.normal(k_w1, (C, C, 3), jnp.float32) / jnp.sqrt(fan_in)
    w2 = jax.random.normal(k_w2, (C, C, 3), jnp.float32) / jnp.sqrt(fan_in)
    # BatchNorm affine params at PyTorch default init.
    g1 = jnp.ones((C,), jnp.float32)
    b1 = jnp.zeros((C,), jnp.float32)
    g2 = jnp.ones((C,), jnp.float32)
    b2 = jnp.zeros((C,), jnp.float32)

    y = jax.block_until_ready(residual_block(x, w1, g1, b1, w2, g2, b2))

    # Pure-JAX reference for correctness.
    def ref(x):
        def conv(h, w):
            return jax.lax.conv_general_dilated(
                h, w, window_strides=(1,), padding=((1, 1),),
                dimension_numbers=("NCH", "OIH", "NCH"))

        def bn(h, g, b):
            m = jnp.mean(h, axis=(0, 2), keepdims=True)
            v = jnp.mean((h - m) ** 2, axis=(0, 2), keepdims=True)
            return (h - m) / jnp.sqrt(v + EPS) * g.reshape(1, -1, 1) + b.reshape(1, -1, 1)

        h = bn(conv(x, w1), g1, b1)
        h = jnp.maximum(h, 0.0)
        h = bn(conv(h, w2), g2, b2)
        return x + h

    y_ref = ref(x)
    err = float(jnp.max(jnp.abs(y - y_ref)))
    assert jnp.allclose(y, y_ref, atol=2e-3, rtol=2e-3), f"max abs err {err}"
    print("KERNEL_OK")
</pallas_src>

<mosaic_0001>
module attributes {stable_mosaic.version = 11 : i64} {
  func.func @residual_block_kernel(%arg0: memref<8x128xf32, #tpu.memory_space<vmem>>, %arg1: memref<8x24xf32, #tpu.memory_space<vmem>>, %arg2: memref<8x1xf32, #tpu.memory_space<vmem>>, %arg3: memref<8x1xf32, #tpu.memory_space<vmem>>, %arg4: memref<8x24xf32, #tpu.memory_space<vmem>>, %arg5: memref<8x1xf32, #tpu.memory_space<vmem>>, %arg6: memref<8x1xf32, #tpu.memory_space<vmem>>, %arg7: memref<1x128xf32, #tpu.memory_space<vmem>>, %arg8: memref<1x128xf32, #tpu.memory_space<vmem>>, %arg9: memref<1x128xf32, #tpu.memory_space<vmem>>, %arg10: memref<8x128xf32, #tpu.memory_space<vmem>>) attributes {dimension_semantics = [], scalar_prefetch = 0 : i64, scratch_operands = 0 : i64, tpu.core_type = #tpu.core_type<tc>} {
    %c0 = arith.constant 0 : index
    %c0_0 = arith.constant 0 : index
    %0 = vector.load %arg0[%c0, %c0_0] : memref<8x128xf32, #tpu.memory_space<vmem>>, vector<8x128xf32>
    %c0_1 = arith.constant 0 : index
    %c0_2 = arith.constant 0 : index
    %1 = vector.load %arg7[%c0_1, %c0_2] : memref<1x128xf32, #tpu.memory_space<vmem>>, vector<1x128xf32>
    %c0_3 = arith.constant 0 : index
    %c0_4 = arith.constant 0 : index
    %2 = vector.load %arg8[%c0_3, %c0_4] : memref<1x128xf32, #tpu.memory_space<vmem>>, vector<1x128xf32>
    %c0_5 = arith.constant 0 : index
    %c0_6 = arith.constant 0 : index
    %3 = vector.load %arg9[%c0_5, %c0_6] : memref<1x128xf32, #tpu.memory_space<vmem>>, vector<1x128xf32>
    %c0_7 = arith.constant 0 : index
    %c0_8 = arith.constant 0 : index
    %4 = vector.load %arg1[%c0_7, %c0_8] : memref<8x24xf32, #tpu.memory_space<vmem>>, vector<8x24xf32>
    %c1_i32 = arith.constant 1 : i32
    %5 = tpu.dynamic_rotate %0 by %c1_i32 dim 1 : vector<8x128xf32>, i32 -> vector<8x128xf32>
    %6 = vector.broadcast %1 : vector<1x128xf32> to vector<8x128xf32>
    %7 = arith.mulf %5, %6 : vector<8x128xf32>
    %8 = vector.broadcast %2 : vector<1x128xf32> to vector<8x128xf32>
    %9 = arith.mulf %0, %8 : vector<8x128xf32>
    %c127_i32 = arith.constant 127 : i32
    %10 = tpu.dynamic_rotate %0 by %c127_i32 dim 1 : vector<8x128xf32>, i32 -> vector<8x128xf32>
    %11 = vector.broadcast %3 : vector<1x128xf32> to vector<8x128xf32>
    %12 = arith.mulf %10, %11 : vector<8x128xf32>
    %13 = tpu.concatenate %7, %9, %12 in 0 : vector<8x128xf32>, vector<8x128xf32>, vector<8x128xf32> -> vector<24x128xf32>
    %cst = arith.constant dense<0.000000e+00> : vector<8x128xf32>
    %14 = tpu.matmul %4, %13, %cst {dimension_numbers = #tpu.dot_dimension_numbers<[1], [0], [0], [1], [0, 0, 1, 1], [], []>} : vector<8x24xf32>, vector<24x128xf32>, vector<8x128xf32> -> vector<8x128xf32>
    %c0_9 = arith.constant 0 : index
    %c0_10 = arith.constant 0 : index
    %15 = vector.load %arg2[%c0_9, %c0_10] : memref<8x1xf32, #tpu.memory_space<vmem>>, vector<8x1xf32>
    %c0_11 = arith.constant 0 : index
    %c0_12 = arith.constant 0 : index
    %16 = vector.load %arg3[%c0_11, %c0_12] : memref<8x1xf32, #tpu.memory_space<vmem>>, vector<8x1xf32>
    %cst_13 = arith.constant dense<0.000000e+00> : vector<8xf32>
    %17 = vector.multi_reduction <add>, %14, %cst_13 [1] : vector<8x128xf32> to vector<8xf32>
    %18 = vector.shape_cast %17 : vector<8xf32> to vector<8x1xf32>
    %cst_14 = arith.constant 3.125000e-02 : f32
    %19 = vector.broadcast %cst_14 : f32 to vector<8x1xf32>
    %20 = arith.mulf %18, %19 : vector<8x1xf32>
    %21 = vector.broadcast %20 : vector<8x1xf32> to vector<8x128xf32>
    %22 = arith.subf %14, %21 : vector<8x128xf32>
    %23 = vector.broadcast %2 : vector<1x128xf32> to vector<8x128xf32>
    %24 = arith.mulf %22, %23 : vector<8x128xf32>
    %25 = arith.mulf %24, %24 : vector<8x128xf32>
    %cst_15 = arith.constant dense<0.000000e+00> : vector<8xf32>
    %26 = vector.multi_reduction <add>, %25, %cst_15 [1] : vector<8x128xf32> to vector<8xf32>
    %27 = vector.shape_cast %26 : vector<8xf32> to vector<8x1xf32>
    %cst_16 = arith.constant 3.125000e-02 : f32
    %28 = vector.broadcast %cst_16 : f32 to vector<8x1xf32>
    %29 = arith.mulf %27, %28 : vector<8x1xf32>
    %cst_17 = arith.constant 9.99999974E-6 : f32
    %30 = vector.broadcast %cst_17 : f32 to vector<8x1xf32>
    %31 = arith.addf %29, %30 : vector<8x1xf32>
    %32 = math.rsqrt %31 : vector<8x1xf32>
    %33 = arith.mulf %15, %32 : vector<8x1xf32>
    %34 = vector.broadcast %33 : vector<8x1xf32> to vector<8x128xf32>
    %35 = arith.mulf %24, %34 : vector<8x128xf32>
    %36 = vector.broadcast %16 : vector<8x1xf32> to vector<8x128xf32>
    %37 = arith.addf %35, %36 : vector<8x128xf32>
    %cst_18 = arith.constant 0.000000e+00 : f32
    %38 = vector.broadcast %cst_18 : f32 to vector<8x128xf32>
    %39 = arith.maximumf %37, %38 : vector<8x128xf32>
    %c0_19 = arith.constant 0 : index
    %c0_20 = arith.constant 0 : index
    %40 = vector.load %arg4[%c0_19, %c0_20] : memref<8x24xf32, #tpu.memory_space<vmem>>, vector<8x24xf32>
    %c1_i32_21 = arith.constant 1 : i32
    %41 = tpu.dynamic_rotate %39 by %c1_i32_21 dim 1 : vector<8x128xf32>, i32 -> vector<8x128xf32>
    %42 = vector.broadcast %1 : vector<1x128xf32> to vector<8x128xf32>
    %43 = arith.mulf %41, %42 : vector<8x128xf32>
    %44 = vector.broadcast %2 : vector<1x128xf32> to vector<8x128xf32>
    %45 = arith.mulf %39, %44 : vector<8x128xf32>
    %c127_i32_22 = arith.constant 127 : i32
    %46 = tpu.dynamic_rotate %39 by %c127_i32_22 dim 1 : vector<8x128xf32>, i32 -> vector<8x128xf32>
    %47 = vector.broadcast %3 : vector<1x128xf32> to vector<8x128xf32>
    %48 = arith.mulf %46, %47 : vector<8x128xf32>
    %49 = tpu.concatenate %43, %45, %48 in 0 : vector<8x128xf32>, vector<8x128xf32>, vector<8x128xf32> -> vector<24x128xf32>
    %cst_23 = arith.constant dense<0.000000e+00> : vector<8x128xf32>
    %50 = tpu.matmul %40, %49, %cst_23 {dimension_numbers = #tpu.dot_dimension_numbers<[1], [0], [0], [1], [0, 0, 1, 1], [], []>} : vector<8x24xf32>, vector<24x128xf32>, vector<8x128xf32> -> vector<8x128xf32>
    %c0_24 = arith.constant 0 : index
    %c0_25 = arith.constant 0 : index
    %51 = vector.load %arg5[%c0_24, %c0_25] : memref<8x1xf32, #tpu.memory_space<vmem>>, vector<8x1xf32>
    %c0_26 = arith.constant 0 : index
    %c0_27 = arith.constant 0 : index
    %52 = vector.load %arg6[%c0_26, %c0_27] : memref<8x1xf32, #tpu.memory_space<vmem>>, vector<8x1xf32>
    %cst_28 = arith.constant dense<0.000000e+00> : vector<8xf32>
    %53 = vector.multi_reduction <add>, %50, %cst_28 [1] : vector<8x128xf32> to vector<8xf32>
    %54 = vector.shape_cast %53 : vector<8xf32> to vector<8x1xf32>
    %cst_29 = arith.constant 3.125000e-02 : f32
    %55 = vector.broadcast %cst_29 : f32 to vector<8x1xf32>
    %56 = arith.mulf %54, %55 : vector<8x1xf32>
    %57 = vector.broadcast %56 : vector<8x1xf32> to vector<8x128xf32>
    %58 = arith.subf %50, %57 : vector<8x128xf32>
    %59 = vector.broadcast %2 : vector<1x128xf32> to vector<8x128xf32>
    %60 = arith.mulf %58, %59 : vector<8x128xf32>
    %61 = arith.mulf %60, %60 : vector<8x128xf32>
    %cst_30 = arith.constant dense<0.000000e+00> : vector<8xf32>
    %62 = vector.multi_reduction <add>, %61, %cst_30 [1] : vector<8x128xf32> to vector<8xf32>
    %63 = vector.shape_cast %62 : vector<8xf32> to vector<8x1xf32>
    %cst_31 = arith.constant 3.125000e-02 : f32
    %64 = vector.broadcast %cst_31 : f32 to vector<8x1xf32>
    %65 = arith.mulf %63, %64 : vector<8x1xf32>
    %cst_32 = arith.constant 9.99999974E-6 : f32
    %66 = vector.broadcast %cst_32 : f32 to vector<8x1xf32>
    %67 = arith.addf %65, %66 : vector<8x1xf32>
    %68 = math.rsqrt %67 : vector<8x1xf32>
    %69 = arith.mulf %51, %68 : vector<8x1xf32>
    %70 = vector.broadcast %69 : vector<8x1xf32> to vector<8x128xf32>
    %71 = arith.mulf %60, %70 : vector<8x128xf32>
    %72 = vector.broadcast %52 : vector<8x1xf32> to vector<8x128xf32>
    %73 = arith.addf %71, %72 : vector<8x128xf32>
    %74 = arith.addf %0, %73 : vector<8x128xf32>
    %c0_33 = arith.constant 0 : index
    %c0_34 = arith.constant 0 : index
    %75 = vector.load %arg10[%c0_33, %c0_34] : memref<8x128xf32, #tpu.memory_space<vmem>>, vector<8x128xf32>
    tpu.vector_store %arg10[%c0_33, %c0_34], %74 {strides = array<i32>} : memref<8x128xf32, #tpu.memory_space<vmem>>, vector<8x128xf32>,
    return
  }
}

</mosaic_0001>

<llo_original>
// kernel: tpu_custom_call.1
$region0: #{tpu_custom_call.1}
  #allocation0 [shape = 'u32[]', space=smem, size = 0x4, offset = 0x4, fixed_abs, tag = 'smem constant byte address 0x4 - core index']
  #allocation1 [shape = 'u32[144,128]{1,0:T(1,128)}', space=vmem, size = 0x12000, scoped, tag = 'internal scratch']
  %s0 = inlined_call_operand.vmem [shape: f32[8,128], index: 0, kind: input, shape index: {}]
  %s1 = inlined_call_operand.vmem [shape: f32[8,24], index: 1, kind: input, shape index: {}]
  %s2 = inlined_call_operand.vmem [shape: f32[8,1], index: 2, kind: input, shape index: {}]
  %s3 = inlined_call_operand.vmem [shape: f32[8,1], index: 3, kind: input, shape index: {}]
  %s4 = inlined_call_operand.vmem [shape: f32[8,24], index: 4, kind: input, shape index: {}]
  %s5 = inlined_call_operand.vmem [shape: f32[8,1], index: 5, kind: input, shape index: {}]
  %s6 = inlined_call_operand.vmem [shape: f32[8,1], index: 6, kind: input, shape index: {}]
  %s7 = inlined_call_operand.vmem [shape: f32[1,128], index: 7, kind: input, shape index: {}]
  %s8 = inlined_call_operand.vmem [shape: f32[1,128], index: 8, kind: input, shape index: {}]
  %s9 = inlined_call_operand.vmem [shape: f32[1,128], index: 9, kind: input, shape index: {}]
  %s10 = inlined_call_operand.hbm [shape: f32[8,128], index: 10, kind: output, shape index: {}]
  %s11 = sld [smem:[#allocation0]]
  $region50: #{tpu_custom_call.1} parent=0
    _
  %s13 = ssub.s32 1, %s11
  %s14 = scalar_select 0, %s13, %s11
  $region1: #{tpu_custom_call.1} parent=0
    #allocation2 [shape = 'u8[4096]{0}', space=vmem, size = 0x1000, scoped, tag = 'output window, operand 0, single buffered']
    #allocation3 [shape = 's32[1]{0}', space=sflag, size = 0x4, scoped, tag = 'scoped memory for tpu_custom_call.1']
    %15 = vsyncpa [#allocation3], 0
    // Predicated region
    $region2: #{tpu_custom_call.1} parent=1 // pred_check
      _
    $region3: #{tpu_custom_call.1} parent=1 // pred_check_branch
      %17 = sbr.rel (0) target = $region5
    $region4: #{tpu_custom_call.1} parent=1 // pred_region
      _
    $region5: #{tpu_custom_call.1} parent=1 // pred_fallthru
      _
    // Predicated region
    $region6: #{tpu_custom_call.1} parent=1 // pred_check
      _
    $region7: #{tpu_custom_call.1} parent=1 // pred_check_branch
      %19 = sbr.rel (0) target = $region9
    $region8: #{tpu_custom_call.1} parent=1 // pred_region
      _
    $region9: #{tpu_custom_call.1} parent=1 // pred_fallthru
      _
    // Predicated region
    $region10: #{tpu_custom_call.1} parent=1 // pred_check
      _
    $region11: #{tpu_custom_call.1} parent=1 // pred_check_branch
      %21 = sbr.rel (0) target = $region13
    $region12: #{tpu_custom_call.1} parent=1 // pred_region
      _
    $region13: #{tpu_custom_call.1} parent=1 // pred_fallthru
      _
    // Predicated region
    $region14: #{tpu_custom_call.1} parent=1 // pred_check
      _
    $region15: #{tpu_custom_call.1} parent=1 // pred_check_branch
      %23 = sbr.rel (0) target = $region17
    $region16: #{tpu_custom_call.1} parent=1 // pred_region
      _
    $region17: #{tpu_custom_call.1} parent=1 // pred_fallthru
      _
    // Predicated region
    $region18: #{tpu_custom_call.1} parent=1 // pred_check
      _
    $region19: #{tpu_custom_call.1} parent=1 // pred_check_branch
      %25 = sbr.rel (0) target = $region21
    $region20: #{tpu_custom_call.1} parent=1 // pred_region
      _
    $region21: #{tpu_custom_call.1} parent=1 // pred_fallthru
      _
    // Predicated region
    $region22: #{tpu_custom_call.1} parent=1 // pred_check
      _
    $region23: #{tpu_custom_call.1} parent=1 // pred_check_branch
      %27 = sbr.rel (0) target = $region25
    $region24: #{tpu_custom_call.1} parent=1 // pred_region
      _
    $region25: #{tpu_custom_call.1} parent=1 // pred_fallthru
      _
    // Predicated region
    $region26: #{tpu_custom_call.1} parent=1 // pred_check
      _
    $region27: #{tpu_custom_call.1} parent=1 // pred_check_branch
      %29 = sbr.rel (0) target = $region29
    $region28: #{tpu_custom_call.1} parent=1 // pred_region
      _
    $region29: #{tpu_custom_call.1} parent=1 // pred_fallthru
      _
    // Predicated region
    $region30: #{tpu_custom_call.1} parent=1 // pred_check
      _
    $region31: #{tpu_custom_call.1} parent=1 // pred_check_branch
      %31 = sbr.rel (0) target = $region33
    $region32: #{tpu_custom_call.1} parent=1 // pred_region
      _
    $region33: #{tpu_custom_call.1} parent=1 // pred_fallthru
      _
    // Predicated region
    $region34: #{tpu_custom_call.1} parent=1 // pred_check
      _
    $region35: #{tpu_custom_call.1} parent=1 // pred_check_branch
      %33 = sbr.rel (0) target = $region37
    $region36: #{tpu_custom_call.1} parent=1 // pred_region
      _
    $region37: #{tpu_custom_call.1} parent=1 // pred_fallthru
      _
    // Predicated region
    $region38: #{tpu_custom_call.1} parent=1 // pred_check
      _
    $region39: #{tpu_custom_call.1} parent=1 // pred_check_branch
      %35 = sbr.rel (0) target = $region41
    $region40: #{tpu_custom_call.1} parent=1 // pred_region
      _
    $region41: #{tpu_custom_call.1} parent=1 // pred_fallthru
      _
    %v36 = vld [vmem:[%s0] sm:$0xff]
    %v37 = vld [vmem:[%s7] sm:$0x1]
    %v38 = vld [vmem:[%s8] sm:$0x1]
    %v39 = vld [vmem:[%s9] sm:$0x1]
    %v40 = vld [vmem:[%s1] sm:$0xff]
    %41 = vrot.lane.b32.xlu0 %v36, 1
    %v42 = vpop.permute.xlu0 %41
    %v44 = vlaneseq
    %v45 = vshrl.u32 %v44, 7
    %v46 = vsub.s32 0, %v45
    %v47 = vrot.slane %v37, %v46
    %v49 = vmul.f32 %v42, %v47
    %v51 = vlaneseq
    %v52 = vshrl.u32 %v51, 7
    %v53 = vsub.s32 0, %v52
    %v54 = vrot.slane %v38, %v53
    %v56 = vmul.f32 %v36, %v54
    %57 = vrot.lane.b32.xlu0 %v36, 127
    %v58 = vpop.permute.xlu0 %57
    %v60 = vlaneseq
    %v61 = vshrl.u32 %v60, 7
    %v62 = vsub.s32 0, %v61
    %v63 = vrot.slane %v39, %v62
    %v65 = vmul.f32 %v58, %v63
    %vm66 = vcmask 195584
    %v68 = vsel %vm66, %v40, 0
    %70 = vmatprep.subr.mxu0 0.0
    %71 = vmatpush1.msra.mxu0 %v49
    %72 = vmatprep.subr.mxu0 0.0
    %73 = vmatpush1.msra.mxu0 %v56
    %74 = vmatprep.subr.mxu0 0.0
    %75 = vmatpush1.msra.mxu0 %v65
    %76 = vmatprep.subr.mxu0 0.0
    %77 = vmatpush1.msra.mxu0 0.0
    %78 = vmatprep.subr.mxu0 0.0
    %79 = vmatpush1.msra.mxu0 0.0
    %80 = vmatprep.subr.mxu0 0.0
    %81 = vmatpush1.msra.mxu0 0.0
    %82 = vmatprep.subr.mxu0 0.0
    %83 = vmatpush1.msra.mxu0 0.0
    %84 = vmatprep.subr.mxu0 0.0
    %85 = vmatpush1.msra.mxu0 0.0
    %86 = vmatprep.subr.mxu0 0.0
    %87 = vmatpush1.msra.mxu0 0.0
    %88 = vmatprep.subr.mxu0 0.0
    %89 = vmatpush1.msra.mxu0 0.0
    %90 = vmatprep.subr.mxu0 0.0
    %91 = vmatpush1.msra.mxu0 0.0
    %92 = vmatprep.subr.mxu0 0.0
    %93 = vmatpush1.msra.mxu0 0.0
    %94 = vmatprep.subr.mxu0 0.0
    %95 = vmatpush1.msra.mxu0 0.0
    %96 = vmatprep.subr.mxu0 0.0
    %97 = vmatpush1.msra.mxu0 0.0
    %98 = vmatprep.subr.mxu0 0.0
    %99 = vmatpush1.msra.mxu0 0.0
    %100 = vmatprep.subr.mxu0 0.0
    %101 = vmatpush1.msra.mxu0 0.0
    %102 = vmatprep.subr.mxu0 0.0
    %103 = vmatpush1.msra.mxu0 0.0
    %104 = vmatprep.subr.mxu0 0.0
    %105 = vmatpush1.msra.mxu0 0.0
    %106 = vmatprep.subr.mxu0 0.0
    %107 = vmatpush1.msra.mxu0 0.0
    %108 = vmatprep.subr.mxu0 0.0
    %109 = vmatpush1.msra.mxu0 0.0
    %110 = vmatprep.subr.mxu0 0.0
    %111 = vmatpush1.msra.mxu0 0.0
    %112 = vmatprep.subr.mxu0 0.0
    %113 = vmatpush1.msra.mxu0 0.0
    %114 = vmatprep.subr.mxu0 0.0
    %115 = vmatpush1.msra.mxu0 0.0
    %116 = vmatprep.subr.mxu0 0.0
    %117 = vmatpush1.msra.mxu0 0.0
    %118 = vmatprep.subr.mxu0 0.0
    %119 = vmatpush1.msra.mxu0 0.0
    %120 = vmatprep.subr.mxu0 0.0
    %121 = vmatpush1.msra.mxu0 0.0
    %122 = vmatprep.subr.mxu0 0.0
    %123 = vmatpush1.msra.mxu0 0.0
    %124 = vmatprep.subr.mxu0 0.0
    %125 = vmatpush1.msra.mxu0 0.0
    %126 = vmatprep.subr.mxu0 0.0
    %127 = vmatpush1.msra.mxu0 0.0
    %128 = vmatprep.subr.mxu0 0.0
    %129 = vmatpush1.msra.mxu0 0.0
    %130 = vmatprep.subr.mxu0 0.0
    %131 = vmatpush1.msra.mxu0 0.0
    %132 = vmatprep.subr.mxu0 0.0
    %133 = vmatpush1.msra.mxu0 0.0
    %134 = vmatprep.mubr.f32.mxu0 0.0
    %135 = vmatmul.mubr.f32.gmra.mrb[0].mxu0 %v68
    %v136 = vpop.f32.mrb[0].mxu0
    %v137 = vadd.f32 0.0, %v136
    %v138 = vpop.f32.mrb[0].mxu0
    %139 = vdwg.mxu0
    %v140 = vld [vmem:[%s2] sm:$0xff]
    %v141 = vld [vmem:[%s3] sm:$0xff]
    %142 = vadd.xlane.f32.xlu0 %v137
    %v143 = vpop.xlane.xlu0 %142
    %v144 = vmul.f32 %v143, 0.03125
    %v145 = vsub.f32 %v137, %v144
    %v146 = vmul.f32 %v145, %v54
    %v147 = vmul.f32 %v146, %v146
    %148 = vadd.xlane.f32.xlu0 %v147
    %v149 = vpop.xlane.xlu0 %148
    %v150 = vmul.f32 %v149, 0.03125
    %v151 = vadd.f32 %v150, 1e-05
    %v152 = vrsqrt.pop %v151
    %v153 = vmul.f32 %v140, %v152
    %155 = vset.pattern.permute.xlu0 0
    %156 = vperm.xlu0 %155, %v153
    %v157 = vpop.permute.xlu0 %156
    %v159 = vmul.f32 %v146, %v157
    %161 = vset.pattern.permute.xlu0 0
    %162 = vperm.xlu0 %161, %v141
    %v163 = vpop.permute.xlu0 %162
    %v165 = vadd.f32 %v159, %v163
    %v166 = vmax.f32 %v165, 0.0
    %v167 = vld [vmem:[%s4] sm:$0xff]
    %168 = vrot.lane.b32.xlu0 %v166, 1
    %v169 = vpop.permute.xlu0 %168
    %v170 = vmul.f32 %v169, %v47
    %v171 = vmul.f32 %v166, %v54
    %172 = vrot.lane.b32.xlu0 %v166, 127
    %v173 = vpop.permute.xlu0 %172
    %v174 = vmul.f32 %v173, %v63
    %v176 = vsel %vm66, %v167, 0
    %178 = vmatprep.subr.mxu0 0.0
    %179 = vmatpush1.msra.mxu0 %v170
    %180 = vmatprep.subr.mxu0 0.0
    %181 = vmatpush1.msra.mxu0 %v171
    %182 = vmatprep.subr.mxu0 0.0
    %183 = vmatpush1.msra.mxu0 %v174
    %184 = vmatprep.subr.mxu0 0.0
    %185 = vmatpush1.msra.mxu0 0.0
    %186 = vmatprep.subr.mxu0 0.0
    %187 = vmatpush1.msra.mxu0 0.0
    %188 = vmatprep.subr.mxu0 0.0
    %189 = vmatpush1.msra.mxu0 0.0
    %190 = vmatprep.subr.mxu0 0.0
    %191 = vmatpush1.msra.mxu0 0.0
    %192 = vmatprep.subr.mxu0 0.0
    %193 = vmatpush1.msra.mxu0 0.0
    %194 = vmatprep.subr.mxu0 0.0
    %195 = vmatpush1.msra.mxu0 0.0
    %196 = vmatprep.subr.mxu0 0.0
    %197 = vmatpush1.msra.mxu0 0.0
    %198 = vmatprep.subr.mxu0 0.0
    %199 = vmatpush1.msra.mxu0 0.0
    %200 = vmatprep.subr.mxu0 0.0
    %201 = vmatpush1.msra.mxu0 0.0
    %202 = vmatprep.subr.mxu0 0.0
    %203 = vmatpush1.msra.mxu0 0.0
    %204 = vmatprep.subr.mxu0 0.0
    %205 = vmatpush1.msra.mxu0 0.0
    %206 = vmatprep.subr.mxu0 0.0
    %207 = vmatpush1.msra.mxu0 0.0
    %208 = vmatprep.subr.mxu0 0.0
    %209 = vmatpush1.msra.mxu0 0.0
    %210 = vmatprep.subr.mxu0 0.0
    %211 = vmatpush1.msra.mxu0 0.0
    %212 = vmatprep.subr.mxu0 0.0
    %213 = vmatpush1.msra.mxu0 0.0
    %214 = vmatprep.subr.mxu0 0.0
    %215 = vmatpush1.msra.mxu0 0.0
    %216 = vmatprep.subr.mxu0 0.0
    %217 = vmatpush1.msra.mxu0 0.0
    %218 = vmatprep.subr.mxu0 0.0
    %219 = vmatpush1.msra.mxu0 0.0
    %220 = vmatprep.subr.mxu0 0.0
    %221 = vmatpush1.msra.mxu0 0.0
    %222 = vmatprep.subr.mxu0 0.0
    %223 = vmatpush1.msra.mxu0 0.0
    %224 = vmatprep.subr.mxu0 0.0
    %225 = vmatpush1.msra.mxu0 0.0
    %226 = vmatprep.subr.mxu0 0.0
    %227 = vmatpush1.msra.mxu0 0.0
    %228 = vmatprep.subr.mxu0 0.0
    %229 = vmatpush1.msra.mxu0 0.0
    %230 = vmatprep.subr.mxu0 0.0
    %231 = vmatpush1.msra.mxu0 0.0
    %232 = vmatprep.subr.mxu0 0.0
    %233 = vmatpush1.msra.mxu0 0.0
    %234 = vmatprep.subr.mxu0 0.0
    %235 = vmatpush1.msra.mxu0 0.0
    %236 = vmatprep.subr.mxu0 0.0
    %237 = vmatpush1.msra.mxu0 0.0
    %238 = vmatprep.subr.mxu0 0.0
    %239 = vmatpush1.msra.mxu0 0.0
    %240 = vmatprep.subr.mxu0 0.0
    %241 = vmatpush1.msra.mxu0 0.0
    %242 = vmatprep.mubr.f32.mxu0 0.0
    %243 = vmatmul.mubr.f32.gmra.mrb[0].mxu0 %v176
    %v244 = vpop.f32.mrb[0].mxu0
    %v245 = vadd.f32 0.0, %v244
    %v246 = vpop.f32.mrb[0].mxu0
    %247 = vdwg.mxu0
    %v248 = vld [vmem:[%s5] sm:$0xff]
    %v249 = vld [vmem:[%s6] sm:$0xff]
    %250 = vadd.xlane.f32.xlu0 %v245
    %v251 = vpop.xlane.xlu0 %250
    %v252 = vmul.f32 %v251, 0.03125
    %v253 = vsub.f32 %v245, %v252
    %v254 = vmul.f32 %v253, %v54
    %v255 = vmul.f32 %v254, %v254
    %256 = vadd.xlane.f32.xlu0 %v255
    %v257 = vpop.xlane.xlu0 %256
    %v258 = vmul.f32 %v257, 0.03125
    %v259 = vadd.f32 %v258, 1e-05
    %v260 = vrsqrt.pop %v259
    %v261 = vmul.f32 %v248, %v260
    %263 = vset.pattern.permute.xlu0 0
    %264 = vperm.xlu0 %263, %v261
    %v265 = vpop.permute.xlu0 %264
    %v267 = vmul.f32 %v254, %v265
    %269 = vset.pattern.permute.xlu0 0
    %270 = vperm.xlu0 %269, %v249
    %v271 = vpop.permute.xlu0 %270
    %v273 = vadd.f32 %v267, %v271
    %v274 = vadd.f32 %v36, %v273
    %275 = vst [vmem:[#allocation2] sm:$0xff] %v274
    // Predicated region
    $region42: #{tpu_custom_call.1} parent=1 // pred_check
      _
    $region43: #{tpu_custom_call.1} parent=1 // pred_check_branch
      %277 = sbr.rel (0) target = $region45
    $region44: #{tpu_custom_call.1} parent=1 // pred_region
      %s279 = ssub.s32 128, 128
      %280 = vsyncadd [#allocation3], %s279
      %s282 = sshll.u32 [#allocation2], 4
      %s283 = int_to_ptr.vmem [resolvable:$true] %s282
      %285 = dma.vmem_to_hbm [thread:$0]  %s283, 128, %s10, [#allocation3]
    $region45: #{tpu_custom_call.1} parent=1 // pred_fallthru
      _
    // Predicated region
    $region46: #{tpu_custom_call.1} parent=1 // pred_check
      _
    $region47: #{tpu_custom_call.1} parent=1 // pred_check_branch
      %287 = sbr.rel (0) target = $region49
    $region48: #{tpu_custom_call.1} parent=1 // pred_region
      %288 = dma.done [#allocation3], 128
    $region49: #{tpu_custom_call.1} parent=1 // pred_fallthru
      _
    %289 = vsyncpa [#allocation3], 1

</llo_original>
